<compile_context>
chip_gen: v5e
topology: v5e:2x2
jax: 0.10.0
libtpu: 0.0.40
codegen_flags: <defaults>
</compile_context>

<pallas_src>
import functools

import jax
import jax.numpy as jnp
from jax.experimental import pallas as pl
from jax.experimental.pallas import tpu as pltpu


def _round_up(x, m):
    return (x + m - 1) // m * m


def _pad2d(x, rows, cols, dtype):
    x = x.astype(dtype)
    pr, pc = rows - x.shape[0], cols - x.shape[1]
    if pr or pc:
        x = jnp.pad(x, ((0, pr), (0, pc)))
    return x


# ---------------------------------------------------------------------------
# Pass 1: deg = rowsum(fill_diag(A, 1)),  dinv = deg^{-1/2}
# ---------------------------------------------------------------------------
def _deg_kernel(adj_ref, dinv_ref, deg_acc, *, tile_n, k_block):
    i = pl.program_id(0)
    k = pl.program_id(1)

    @pl.when(k == 0)
    def _init():
        deg_acc[...] = jnp.zeros_like(deg_acc)

    # fill_diag(A, 1.0) realized analytically via a global-index mask.
    a = adj_ref[...].astype(jnp.float32)                    # bf16 -> f32 (VPU)
    r = jax.lax.broadcasted_iota(jnp.int32, (tile_n, k_block), 0) + i * tile_n
    c = jax.lax.broadcasted_iota(jnp.int32, (tile_n, k_block), 1) + k * k_block
    a_hat = jnp.where(r == c, 1.0, a)
    deg_acc[...] += jnp.sum(a_hat, axis=1, keepdims=True)

    @pl.when(k == pl.num_programs(1) - 1)
    def _finalize():
        deg = deg_acc[...]
        dinv_ref[...] = jnp.where(deg > 0.0, jax.lax.rsqrt(deg), 0.0)  # EUP


# ---------------------------------------------------------------------------
# Pass 2: H_scaled = dinv * (X @ W)   (tiled over the f_in reduction)
# ---------------------------------------------------------------------------
def _xw_kernel(feat_ref, w_ref, dinv_ref, h_ref, acc_ref):
    kf = pl.program_id(1)

    @pl.when(kf == 0)
    def _init():
        acc_ref[...] = jnp.zeros_like(acc_ref)

    # bf16 MXU operands straight from HBM, f32 accumulate.
    acc_ref[...] += jnp.dot(feat_ref[...], w_ref[...],
                            preferred_element_type=jnp.float32)

    @pl.when(kf == pl.num_programs(1) - 1)
    def _finalize():
        h_ref[...] = (acc_ref[...] * dinv_ref[...]).astype(h_ref.dtype)


# ---------------------------------------------------------------------------
# Pass 3: out = act(dinv_row * (A_hat @ H_scaled) + bias)
# ---------------------------------------------------------------------------
def _agg_kernel(adj_ref, h_ref, dinv_ref, b_ref, out_ref, *, tile_n, k_block,
                h_resident, apply_relu):
    i = pl.program_id(0)
    k = pl.program_id(1)

    @pl.when(k == 0)
    def _init():
        out_ref[...] = jnp.zeros_like(out_ref)

    a = adj_ref[...]                                        # bf16, no cast
    r = jax.lax.broadcasted_iota(jnp.int32, (tile_n, k_block), 0) + i * tile_n
    c = jax.lax.broadcasted_iota(jnp.int32, (tile_n, k_block), 1) + k * k_block
    a_hat = jnp.where(r == c, jnp.ones_like(a), a)          # fused self-loop

    if h_resident:
        start = pl.multiple_of(k * k_block, k_block)
        h_blk = h_ref[pl.ds(start, k_block), :]              # full-resident H
    else:
        h_blk = h_ref[...]                                    # streamed H block

    out_ref[...] += jnp.dot(a_hat, h_blk, preferred_element_type=jnp.float32)

    @pl.when(k == pl.num_programs(1) - 1)
    def _finalize():
        out = out_ref[...] * dinv_ref[...] + b_ref[...]
        if apply_relu:
            out = jnp.maximum(out, 0.0)
        out_ref[...] = out


# ---------------------------------------------------------------------------
# Wrapper
# ---------------------------------------------------------------------------
def gcn_one_pyg_forward(feat, adj, weight, bias_conv, bias_extra,
                        activation=None):
    """Pallas implementation of GCN_one_pyg.forward(feat, adj)."""
    # TODO(synk): arbitrary Python activation callables are not fused; only
    # None / "relu" are handled inside the kernel.
    # TODO(synk): adjacency is streamed as bf16 (exact for 0/1 adjacencies);
    # real-valued edge weights would be bf16-quantized.
    n, f_in = feat.shape
    f_out = weight.shape[1]

    tile_n = 256 if n > 128 else 128
    n_pad = _round_up(n, tile_n)
    nb = n_pad // tile_n

    # Streamed adjacency-column block: a multiple of tile_n that divides n_pad,
    # capped at 2048 lanes (wide blocks amortize per-grid-step overhead).
    max_kc = max(1, min(nb, 2048 // tile_n))
    kc = next(m for m in range(max_kc, 0, -1) if nb % m == 0)
    k_block = kc * tile_n
    nbk = n_pad // k_block

    f_in_pad = _round_up(f_in, 128)
    f_out_pad = _round_up(f_out, 128)        # lane-dense output stores
    kf_block = min(f_in_pad, 512)
    while f_in_pad % kf_block:
        kf_block -= 128
    nkf = f_in_pad // kf_block

    # Pre-cast all MXU operands to bf16 in the wrapper (pad + cast fused by
    # XLA); halves adjacency/feature HBM traffic, removes in-kernel casts.
    adj_p = _pad2d(adj, n_pad, n_pad, jnp.bfloat16)
    feat_p = _pad2d(feat, n_pad, f_in_pad, jnp.bfloat16)
    w_p = _pad2d(weight, f_in_pad, f_out_pad, jnp.bfloat16)
    # GCNConv's own bias and the module's extra self.bias fold into one add.
    b_total = (bias_conv + bias_extra).astype(jnp.float32).reshape(1, f_out)
    b_p = _pad2d(b_total, 1, f_out_pad, jnp.float32)

    cparams = pltpu.CompilerParams(
        dimension_semantics=("parallel", "arbitrary"),   # row axis -> 2 TCs on v7x
        vmem_limit_bytes=40 * 1024 * 1024,               # safe on v5e/v6e/v7x
    )

    # ---- pass 1: degrees / dinv (pure wide-block adjacency rowsum) ----
    dinv = pl.pallas_call(
        functools.partial(_deg_kernel, tile_n=tile_n, k_block=k_block),
        out_shape=jax.ShapeDtypeStruct((n_pad, 1), jnp.float32),
        grid_spec=pltpu.PrefetchScalarGridSpec(
            num_scalar_prefetch=0,
            grid=(nb, nbk),
            in_specs=[pl.BlockSpec((tile_n, k_block), lambda i, k: (i, k))],
            out_specs=pl.BlockSpec((tile_n, 1), lambda i, k: (i, 0)),
            scratch_shapes=[pltpu.VMEM((tile_n, 1), jnp.float32)],
        ),
        compiler_params=cparams,
    )(adj_p)

    # ---- pass 2: H_scaled = dinv * (X @ W) ----
    h_scaled = pl.pallas_call(
        _xw_kernel,
        out_shape=jax.ShapeDtypeStruct((n_pad, f_out_pad), jnp.bfloat16),
        grid_spec=pltpu.PrefetchScalarGridSpec(
            num_scalar_prefetch=0,
            grid=(nb, nkf),
            in_specs=[
                pl.BlockSpec((tile_n, kf_block), lambda i, kf: (i, kf)),     # feat
                pl.BlockSpec((kf_block, f_out_pad), lambda i, kf: (kf, 0)),  # weight
                pl.BlockSpec((tile_n, 1), lambda i, kf: (i, 0)),             # dinv
            ],
            out_specs=pl.BlockSpec((tile_n, f_out_pad), lambda i, kf: (i, 0)),
            scratch_shapes=[pltpu.VMEM((tile_n, f_out_pad), jnp.float32)],
        ),
        compiler_params=cparams,
    )(feat_p, w_p, dinv)

    # ---- pass 3: out = act(dinv_row * (A_hat @ H_scaled) + bias) ----
    h_bytes = n_pad * f_out_pad * 2
    h_resident = h_bytes <= 8 * 1024 * 1024          # full-VMEM residency of H
    if h_resident:
        h_spec = pl.BlockSpec((n_pad, f_out_pad), lambda i, k: (0, 0))
    else:
        h_spec = pl.BlockSpec((k_block, f_out_pad), lambda i, k: (k, 0))

    out_p = pl.pallas_call(
        functools.partial(_agg_kernel, tile_n=tile_n, k_block=k_block,
                          h_resident=h_resident,
                          apply_relu=(activation == "relu")),
        out_shape=jax.ShapeDtypeStruct((n_pad, f_out_pad), jnp.float32),
        grid_spec=pltpu.PrefetchScalarGridSpec(
            num_scalar_prefetch=0,
            grid=(nb, nbk),
            in_specs=[
                pl.BlockSpec((tile_n, k_block), lambda i, k: (i, k)),   # adj (bf16)
                h_spec,                                                 # H_scaled
                pl.BlockSpec((tile_n, 1), lambda i, k: (i, 0)),         # dinv
                pl.BlockSpec((1, f_out_pad), lambda i, k: (0, 0)),      # bias
            ],
            out_specs=pl.BlockSpec((tile_n, f_out_pad), lambda i, k: (i, 0)),
        ),
        compiler_params=cparams,
    )(adj_p, h_scaled, dinv, b_p)

    return out_p[:n, :f_out]


def _reference(feat, adj, weight, bias_conv, bias_extra, activation=None):
    """Pure-JAX f32 reference of the same math (for correctness check)."""
    n = adj.shape[0]
    a_hat = adj.at[jnp.arange(n), jnp.arange(n)].set(1.0)
    deg = a_hat.sum(axis=1)
    dinv = jnp.where(deg > 0.0, deg ** -0.5, 0.0)
    a_norm = dinv[:, None] * a_hat * dinv[None, :]
    out = a_norm @ (feat @ weight) + bias_conv + bias_extra
    if activation == "relu":
        out = jnp.maximum(out, 0.0)
    return out


if __name__ == "__main__":
    key = jax.random.PRNGKey(0)
    k1, k2, k3 = jax.random.split(key, 3)

    N, F_IN, F_OUT = 16, 8, 32

    feat = jax.random.normal(k1, (N, F_IN), dtype=jnp.float32)

    # deterministic random symmetric 0/1 adjacency with zero diagonal
    a = (jax.random.uniform(k2, (N, N)) < 0.3).astype(jnp.float32)
    adj = jnp.maximum(a, a.T) * (1.0 - jnp.eye(N, dtype=jnp.float32))

    # GCNConv weight (glorot-style deterministic init); both biases are
    # zero-initialized exactly as in the module's __init__.
    weight = jax.random.normal(k3, (F_IN, F_OUT), dtype=jnp.float32) * (
        1.0 / jnp.sqrt(jnp.float32(F_IN)))
    bias_conv = jnp.zeros((F_OUT,), jnp.float32)   # GCNConv's own bias
    bias_extra = jnp.zeros((F_OUT,), jnp.float32)  # module's self.bias (fill_(0.0))

    out = gcn_one_pyg_forward(feat, adj, weight, bias_conv, bias_extra,
                              activation="relu")
    out = jax.block_until_ready(out)

    ref = _reference(feat, adj, weight, bias_conv, bias_extra,
                     activation="relu")
    assert out.shape == (N, F_OUT)
    # bf16 MXU operands -> compare against the f32 reference with a bf16-level
    # tolerance (adjacency 0/1 entries are exact in bf16).
    assert jnp.allclose(out, ref, atol=5e-2, rtol=5e-2), "mismatch vs reference"

    print("KERNEL_OK")
</pallas_src>

<mosaic_0001>
module attributes {stable_mosaic.version = 11 : i64} {
  func.func @_deg_kernel(%arg0: i32, %arg1: i32, %arg2: memref<128x128xbf16, #tpu.memory_space<vmem>>, %arg3: memref<128x1xf32, #tpu.memory_space<vmem>>, %arg4: memref<128x1xf32, #tpu.memory_space<vmem>>) attributes {dimension_semantics = [#tpu.dimension_semantics<parallel>, #tpu.dimension_semantics<arbitrary>], iteration_bounds = array<i64: 1, 1>, scalar_prefetch = 0 : i64, scratch_operands = 1 : i64, tpu.core_type = #tpu.core_type<tc>, window_params = [{transform_indices = @transform_0, window_bounds = array<i64: 128, 128>}, {transform_indices = @transform_1, window_bounds = array<i64: 128, 1>}]} {
    %c0_i32 = arith.constant 0 : i32
    %0 = arith.cmpi eq, %arg1, %c0_i32 : i32
    %1 = arith.extui %0 : i1 to i32
    %c0_i32_0 = arith.constant 0 : i32
    %2 = arith.cmpi ne, %1, %c0_i32_0 : i32
    scf.if %2 {
      %cst_10 = arith.constant 0.000000e+00 : f32
      %24 = vector.broadcast %cst_10 : f32 to vector<128x1xf32>
      %c0_11 = arith.constant 0 : index
      %c0_12 = arith.constant 0 : index
      %25 = vector.load %arg4[%c0_11, %c0_12] : memref<128x1xf32, #tpu.memory_space<vmem>>, vector<128x1xf32>
      tpu.vector_store %arg4[%c0_11, %c0_12], %24 {strides = array<i32>} : memref<128x1xf32, #tpu.memory_space<vmem>>, vector<128x1xf32>,
    } else {
    }
    %c0 = arith.constant 0 : index
    %c0_1 = arith.constant 0 : index
    %3 = vector.load %arg2[%c0, %c0_1] : memref<128x128xbf16, #tpu.memory_space<vmem>>, vector<128x128xbf16>
    %4 = arith.extf %3 : vector<128x128xbf16> to vector<128x128xf32>
    %5 = tpu.iota {dimensions = array<i32: 0>} : vector<128x128xi32>
    %c128_i32 = arith.constant 128 : i32
    %6 = arith.muli %arg0, %c128_i32 : i32
    %7 = vector.broadcast %6 : i32 to vector<128x128xi32>
    %8 = arith.addi %5, %7 : vector<128x128xi32>
    %9 = tpu.iota {dimensions = array<i32: 1>} : vector<128x128xi32>
    %c128_i32_2 = arith.constant 128 : i32
    %10 = arith.muli %arg1, %c128_i32_2 : i32
    %11 = vector.broadcast %10 : i32 to vector<128x128xi32>
    %12 = arith.addi %9, %11 : vector<128x128xi32>
    %13 = arith.cmpi eq, %8, %12 : vector<128x128xi32>
    %cst = arith.constant 1.000000e+00 : f32
    %14 = vector.broadcast %cst : f32 to vector<128x128xf32>
    %15 = arith.select %13, %14, %4 : vector<128x128xi1>, vector<128x128xf32>
    %c0_3 = arith.constant 0 : index
    %c0_4 = arith.constant 0 : index
    %16 = vector.load %arg4[%c0_3, %c0_4] : memref<128x1xf32, #tpu.memory_space<vmem>>, vector<128x1xf32>
    %cst_5 = arith.constant dense<0.000000e+00> : vector<128xf32>
    %17 = vector.multi_reduction <add>, %15, %cst_5 [1] : vector<128x128xf32> to vector<128xf32>
    %18 = vector.shape_cast %17 : vector<128xf32> to vector<128x1xf32>
    %19 = arith.addf %16, %18 : vector<128x1xf32>
    %c0_6 = arith.constant 0 : index
    %c0_7 = arith.constant 0 : index
    %20 = vector.load %arg4[%c0_6, %c0_7] : memref<128x1xf32, #tpu.memory_space<vmem>>, vector<128x1xf32>
    tpu.vector_store %arg4[%c0_6, %c0_7], %19 {strides = array<i32>} : memref<128x1xf32, #tpu.memory_space<vmem>>, vector<128x1xf32>,
    %c0_i32_8 = arith.constant 0 : i32
    %21 = arith.cmpi eq, %arg1, %c0_i32_8 : i32
    %22 = arith.extui %21 : i1 to i32
    %c0_i32_9 = arith.constant 0 : i32
    %23 = arith.cmpi ne, %22, %c0_i32_9 : i32
    scf.if %23 {
      %c0_10 = arith.constant 0 : index
      %c0_11 = arith.constant 0 : index
      %24 = vector.load %arg4[%c0_10, %c0_11] : memref<128x1xf32, #tpu.memory_space<vmem>>, vector<128x1xf32>
      %cst_12 = arith.constant 0.000000e+00 : f32
      %25 = vector.broadcast %cst_12 : f32 to vector<128x1xf32>
      %26 = arith.cmpf ogt, %24, %25 : vector<128x1xf32>
      %27 = math.rsqrt %24 : vector<128x1xf32>
      %cst_13 = arith.constant 0.000000e+00 : f32
      %28 = vector.broadcast %cst_13 : f32 to vector<128x1xf32>
      %29 = arith.select %26, %27, %28 : vector<128x1xi1>, vector<128x1xf32>
      %c0_14 = arith.constant 0 : index
      %c0_15 = arith.constant 0 : index
      %30 = vector.load %arg3[%c0_14, %c0_15] : memref<128x1xf32, #tpu.memory_space<vmem>>, vector<128x1xf32>
      tpu.vector_store %arg3[%c0_14, %c0_15], %29 {strides = array<i32>} : memref<128x1xf32, #tpu.memory_space<vmem>>, vector<128x1xf32>,
    } else {
    }
    return
  }
  func.func @transform_0(%arg0: i32, %arg1: i32) -> (i32, i32) {
    %c0_i32 = arith.constant 0 : i32
    return %arg0, %arg1 : i32, i32
  }
  func.func @transform_1(%arg0: i32, %arg1: i32) -> (i32, i32) {
    %c0_i32 = arith.constant 0 : i32
    %c0_i32_0 = arith.constant 0 : i32
    return %arg0, %c0_i32 : i32, i32
  }
}

</mosaic_0001>

<llo_original>
// kernel: tpu_custom_call.1
$region0: #{tpu_custom_call.1}
  #allocation0 [shape = 'u32[]', space=smem, size = 0x4, offset = 0x4, fixed_abs, tag = 'smem constant byte address 0x4 - core index']
  #allocation1 [shape = 'u32[72,128]{1,0:T(1,128)}', space=vmem, size = 0x9000, scoped, tag = 'internal scratch']
  #allocation2 [shape = 'f32[128,1]{1,0:T(8,128)}', space=vmem, size = 0x10000, scoped, tag = 'scratch operand']
  %s0 = inlined_call_operand.hbm [shape: bf16[128,128], index: 0, kind: input, shape index: {}]
  %s1 = inlined_call_operand.vmem [shape: f32[128,1], index: 1, kind: output, shape index: {}]
  %s2 = sld [smem:[#allocation0]]
  $region26: #{tpu_custom_call.1} parent=0
    _
  %s4 = ssub.s32 1, %s2
  %s5 = scalar_select 0, %s4, %s2
  $region1: #{tpu_custom_call.1} parent=0
    #allocation3 [shape = 'u8[32768]{0}', space=vmem, size = 0x8000, scoped, tag = 'input window, operand 0, single buffered']
    #allocation4 [shape = 's32[1]{0}', space=sflag, size = 0x4, scoped, tag = 'scoped memory for tpu_custom_call.1']
    %6 = vsyncpa [#allocation4], 0
    // Predicated region
    $region2: #{tpu_custom_call.1} parent=1 // pred_check
      _
    $region3: #{tpu_custom_call.1} parent=1 // pred_check_branch
      %8 = sbr.rel (0) target = $region5
    $region4: #{tpu_custom_call.1} parent=1 // pred_region
      %10 = vsyncadd [#allocation4], 0
      %s11 = sshll.u32 %s0, 4
      %s12 = int_to_ptr.hbm [resolvable:$true] %s11
      %s13 = sshll.u32 [#allocation3], 4
      %s14 = int_to_ptr.vmem [resolvable:$true] %s13
      %19 = dma.hbm_to_vmem [thread:$0]  %s12, 1024, %s14, [#allocation4], 64, 64, 4
    $region5: #{tpu_custom_call.1} parent=1 // pred_fallthru
      _
    // Predicated region
    $region6: #{tpu_custom_call.1} parent=1 // pred_check
      _
    $region7: #{tpu_custom_call.1} parent=1 // pred_check_branch
      %21 = sbr.rel (0) target = $region9
    $region8: #{tpu_custom_call.1} parent=1 // pred_region
      %23 = dma.done [#allocation4], 1024
    $region9: #{tpu_custom_call.1} parent=1 // pred_fallthru
      _
    %p24 = scmp.eq.s32.totalorder 0, 0
    // Predicated region
    $region10: #{tpu_custom_call.1} parent=1 // pred_check
      %p25 = pneg %p24
    $region11: #{tpu_custom_call.1} parent=1 // pred_check_branch
      %27 = sbr.rel (%p25) target = $region13
    $region12: #{tpu_custom_call.1} parent=1 // pred_region
      %vm28 = vcmask 7168
      %29 = vst.msk [vmem:[#allocation2] sm:$0xff] %vm28, 0.0
      %30 = vst.msk [vmem:[#allocation2 + $0x8] sm:$0xff] %vm28, 0.0
      %31 = vst.msk [vmem:[#allocation2 + $0x10] sm:$0xff] %vm28, 0.0
      %32 = vst.msk [vmem:[#allocation2 + $0x18] sm:$0xff] %vm28, 0.0
      %33 = vst.msk [vmem:[#allocation2 + $0x20] sm:$0xff] %vm28, 0.0
      %34 = vst.msk [vmem:[#allocation2 + $0x28] sm:$0xff] %vm28, 0.0
      %35 = vst.msk [vmem:[#allocation2 + $0x30] sm:$0xff] %vm28, 0.0
      %36 = vst.msk [vmem:[#allocation2 + $0x38] sm:$0xff] %vm28, 0.0
      %37 = vst.msk [vmem:[#allocation2 + $0x40] sm:$0xff] %vm28, 0.0
      %38 = vst.msk [vmem:[#allocation2 + $0x48] sm:$0xff] %vm28, 0.0
      %39 = vst.msk [vmem:[#allocation2 + $0x50] sm:$0xff] %vm28, 0.0
      %40 = vst.msk [vmem:[#allocation2 + $0x58] sm:$0xff] %vm28, 0.0
      %41 = vst.msk [vmem:[#allocation2 + $0x60] sm:$0xff] %vm28, 0.0
      %42 = vst.msk [vmem:[#allocation2 + $0x68] sm:$0xff] %vm28, 0.0
      %43 = vst.msk [vmem:[#allocation2 + $0x70] sm:$0xff] %vm28, 0.0
      %44 = vst.msk [vmem:[#allocation2 + $0x78] sm:$0xff] %vm28, 0.0
    $region13: #{tpu_custom_call.1} parent=1 // pred_fallthru
      _
    %v45 = vld [vmem:[#allocation3] sm:$0xf]
    %v46 = vld [vmem:[#allocation3 + $0x4] sm:$0xf]
    %v47 = vld [vmem:[#allocation3 + $0x8] sm:$0xf]
    %v48 = vld [vmem:[#allocation3 + $0xc] sm:$0xf]
    %v49 = vld [vmem:[#allocation3 + $0x10] sm:$0xf]
    %v50 = vld [vmem:[#allocation3 + $0x14] sm:$0xf]
    %v51 = vld [vmem:[#allocation3 + $0x18] sm:$0xf]
    %v52 = vld [vmem:[#allocation3 + $0x1c] sm:$0xf]
    %v53 = vld [vmem:[#allocation3 + $0x20] sm:$0xf]
    %v54 = vld [vmem:[#allocation3 + $0x24] sm:$0xf]
    %v55 = vld [vmem:[#allocation3 + $0x28] sm:$0xf]
    %v56 = vld [vmem:[#allocation3 + $0x2c] sm:$0xf]
    %v57 = vld [vmem:[#allocation3 + $0x30] sm:$0xf]
    %v58 = vld [vmem:[#allocation3 + $0x34] sm:$0xf]
    %v59 = vld [vmem:[#allocation3 + $0x38] sm:$0xf]
    %v60 = vld [vmem:[#allocation3 + $0x3c] sm:$0xf]
    %v61 = vunpack.c.l.bf16 %v45
    %v62 = vunpack.c.l.bf16 %v46
    %v63 = vunpack.c.l.bf16 %v47
    %v64 = vunpack.c.l.bf16 %v48
    %v65 = vunpack.c.l.bf16 %v49
    %v66 = vunpack.c.l.bf16 %v50
    %v67 = vunpack.c.l.bf16 %v51
    %v68 = vunpack.c.l.bf16 %v52
    %v69 = vunpack.c.l.bf16 %v53
    %v70 = vunpack.c.l.bf16 %v54
    %v71 = vunpack.c.l.bf16 %v55
    %v72 = vunpack.c.l.bf16 %v56
    %v73 = vunpack.c.l.bf16 %v57
    %v74 = vunpack.c.l.bf16 %v58
    %v75 = vunpack.c.l.bf16 %v59
    %v76 = vunpack.c.l.bf16 %v60
    %v77 = vlaneseq
    %v78 = vshrl.u32 %v77, 7
    %v79 = vadd.s32 %v78, 8
    %v80 = vadd.s32 %v78, 16
    %v81 = vadd.s32 %v78, 24
    %v82 = vadd.s32 %v78, 32
    %v83 = vadd.s32 %v78, 40
    %v84 = vadd.s32 %v78, 48
    %v85 = vadd.s32 %v78, 56
    %v86 = vadd.s32 %v78, 64
    %v87 = vadd.s32 %v78, 72
    %v88 = vadd.s32 %v78, 80
    %v89 = vadd.s32 %v78, 88
    %v90 = vadd.s32 %v78, 96
    %v91 = vadd.s32 %v78, 104
    %v92 = vadd.s32 %v78, 112
    %v93 = vadd.s32 %v78, 120
    %s94 = smul.u32 0, 128
    %v95 = vstv %s94
    %v96 = vadd.s32 %v78, %v95
    %v97 = vadd.s32 %v79, %v95
    %v98 = vadd.s32 %v80, %v95
    %v99 = vadd.s32 %v81, %v95
    %v100 = vadd.s32 %v82, %v95
    %v101 = vadd.s32 %v83, %v95
    %v102 = vadd.s32 %v84, %v95
    %v103 = vadd.s32 %v85, %v95
    %v104 = vadd.s32 %v86, %v95
    %v105 = vadd.s32 %v87, %v95
    %v106 = vadd.s32 %v88, %v95
    %v107 = vadd.s32 %v89, %v95
    %v108 = vadd.s32 %v90, %v95
    %v109 = vadd.s32 %v91, %v95
    %v110 = vadd.s32 %v92, %v95
    %v111 = vadd.s32 %v93, %v95
    %v112 = vlaneseq
    %v113 = vand.u32 %v112, 127
    %s114 = smul.u32 0, 128
    %v115 = vstv %s114
    %v116 = vadd.s32 %v113, %v115
    %vm117 = vcmp.eq.s32.totalorder %v96, %v116
    %vm118 = vcmp.eq.s32.totalorder %v97, %v116
    %vm119 = vcmp.eq.s32.totalorder %v98, %v116
    %vm120 = vcmp.eq.s32.totalorder %v99, %v116
    %vm121 = vcmp.eq.s32.totalorder %v100, %v116
    %vm122 = vcmp.eq.s32.totalorder %v101, %v116
    %vm123 = vcmp.eq.s32.totalorder %v102, %v116
    %vm124 = vcmp.eq.s32.totalorder %v103, %v116
    %vm125 = vcmp.eq.s32.totalorder %v104, %v116
    %vm126 = vcmp.eq.s32.totalorder %v105, %v116
    %vm127 = vcmp.eq.s32.totalorder %v106, %v116
    %vm128 = vcmp.eq.s32.totalorder %v107, %v116
    %vm129 = vcmp.eq.s32.totalorder %v108, %v116
    %vm130 = vcmp.eq.s32.totalorder %v109, %v116
    %vm131 = vcmp.eq.s32.totalorder %v110, %v116
    %vm132 = vcmp.eq.s32.totalorder %v111, %v116
    %v133 = vsel %vm117, 1.0, %v61
    %v134 = vsel %vm118, 1.0, %v62
    %v135 = vsel %vm119, 1.0, %v63
    %v136 = vsel %vm120, 1.0, %v64
    %v137 = vsel %vm121, 1.0, %v65
    %v138 = vsel %vm122, 1.0, %v66
    %v139 = vsel %vm123, 1.0, %v67
    %v140 = vsel %vm124, 1.0, %v68
    %v141 = vsel %vm125, 1.0, %v69
    %v142 = vsel %vm126, 1.0, %v70
    %v143 = vsel %vm127, 1.0, %v71
    %v144 = vsel %vm128, 1.0, %v72
    %v145 = vsel %vm129, 1.0, %v73
    %v146 = vsel %vm130, 1.0, %v74
    %v147 = vsel %vm131, 1.0, %v75
    %v148 = vsel %vm132, 1.0, %v76
    %v149 = vld [vmem:[#allocation2] sm:$0xff]
    %v150 = vld [vmem:[#allocation2 + $0x8] sm:$0xff]
    %v151 = vld [vmem:[#allocation2 + $0x10] sm:$0xff]
    %v152 = vld [vmem:[#allocation2 + $0x18] sm:$0xff]
    %v153 = vld [vmem:[#allocation2 + $0x20] sm:$0xff]
    %v154 = vld [vmem:[#allocation2 + $0x28] sm:$0xff]
    %v155 = vld [vmem:[#allocation2 + $0x30] sm:$0xff]
    %v156 = vld [vmem:[#allocation2 + $0x38] sm:$0xff]
    %v157 = vld [vmem:[#allocation2 + $0x40] sm:$0xff]
    %v158 = vld [vmem:[#allocation2 + $0x48] sm:$0xff]
    %v159 = vld [vmem:[#allocation2 + $0x50] sm:$0xff]
    %v160 = vld [vmem:[#allocation2 + $0x58] sm:$0xff]
    %v161 = vld [vmem:[#allocation2 + $0x60] sm:$0xff]
    %v162 = vld [vmem:[#allocation2 + $0x68] sm:$0xff]
    %v163 = vld [vmem:[#allocation2 + $0x70] sm:$0xff]
    %v164 = vld [vmem:[#allocation2 + $0x78] sm:$0xff]
    %165 = vadd.xlane.f32.xlu0 %v133
    %v166 = vpop.xlane.xlu0 %165
    %167 = vadd.xlane.f32.xlu0 %v134
    %v168 = vpop.xlane.xlu0 %167
    %169 = vadd.xlane.f32.xlu0 %v135
    %v170 = vpop.xlane.xlu0 %169
    %171 = vadd.xlane.f32.xlu0 %v136
    %v172 = vpop.xlane.xlu0 %171
    %173 = vadd.xlane.f32.xlu0 %v137
    %v174 = vpop.xlane.xlu0 %173
    %175 = vadd.xlane.f32.xlu0 %v138
    %v176 = vpop.xlane.xlu0 %175
    %177 = vadd.xlane.f32.xlu0 %v139
    %v178 = vpop.xlane.xlu0 %177
    %179 = vadd.xlane.f32.xlu0 %v140
    %v180 = vpop.xlane.xlu0 %179
    %181 = vadd.xlane.f32.xlu0 %v141
    %v182 = vpop.xlane.xlu0 %181
    %183 = vadd.xlane.f32.xlu0 %v142
    %v184 = vpop.xlane.xlu0 %183
    %185 = vadd.xlane.f32.xlu0 %v143
    %v186 = vpop.xlane.xlu0 %185
    %187 = vadd.xlane.f32.xlu0 %v144
    %v188 = vpop.xlane.xlu0 %187
    %189 = vadd.xlane.f32.xlu0 %v145
    %v190 = vpop.xlane.xlu0 %189
    %191 = vadd.xlane.f32.xlu0 %v146
    %v192 = vpop.xlane.xlu0 %191
    %193 = vadd.xlane.f32.xlu0 %v147
    %v194 = vpop.xlane.xlu0 %193
    %195 = vadd.xlane.f32.xlu0 %v148
    %v196 = vpop.xlane.xlu0 %195
    %v197 = vadd.f32 %v149, %v166
    %v198 = vadd.f32 %v150, %v168
    %v199 = vadd.f32 %v151, %v170
    %v200 = vadd.f32 %v152, %v172
    %v201 = vadd.f32 %v153, %v174
    %v202 = vadd.f32 %v154, %v176
    %v203 = vadd.f32 %v155, %v178
    %v204 = vadd.f32 %v156, %v180
    %v205 = vadd.f32 %v157, %v182
    %v206 = vadd.f32 %v158, %v184
    %v207 = vadd.f32 %v159, %v186
    %v208 = vadd.f32 %v160, %v188
    %v209 = vadd.f32 %v161, %v190
    %v210 = vadd.f32 %v162, %v192
    %v211 = vadd.f32 %v163, %v194
    %v212 = vadd.f32 %v164, %v196
    %vm213 = vcmask 7168
    %214 = vst.msk [vmem:[#allocation2] sm:$0xff] %vm213, %v197
    %215 = vst.msk [vmem:[#allocation2 + $0x8] sm:$0xff] %vm213, %v198
    %216 = vst.msk [vmem:[#allocation2 + $0x10] sm:$0xff] %vm213, %v199
    %217 = vst.msk [vmem:[#allocation2 + $0x18] sm:$0xff] %vm213, %v200
    %218 = vst.msk [vmem:[#allocation2 + $0x20] sm:$0xff] %vm213, %v201
    %219 = vst.msk [vmem:[#allocation2 + $0x28] sm:$0xff] %vm213, %v202
    %220 = vst.msk [vmem:[#allocation2 + $0x30] sm:$0xff] %vm213, %v203
    %221 = vst.msk [vmem:[#allocation2 + $0x38] sm:$0xff] %vm213, %v204
    %222 = vst.msk [vmem:[#allocation2 + $0x40] sm:$0xff] %vm213, %v205
    %223 = vst.msk [vmem:[#allocation2 + $0x48] sm:$0xff] %vm213, %v206
    %224 = vst.msk [vmem:[#allocation2 + $0x50] sm:$0xff] %vm213, %v207
    %225 = vst.msk [vmem:[#allocation2 + $0x58] sm:$0xff] %vm213, %v208
    %226 = vst.msk [vmem:[#allocation2 + $0x60] sm:$0xff] %vm213, %v209
    %227 = vst.msk [vmem:[#allocation2 + $0x68] sm:$0xff] %vm213, %v210
    %228 = vst.msk [vmem:[#allocation2 + $0x70] sm:$0xff] %vm213, %v211
    %229 = vst.msk [vmem:[#allocation2 + $0x78] sm:$0xff] %vm213, %v212
    // Predicated region
    $region14: #{tpu_custom_call.1} parent=1 // pred_check
      %p230 = pneg %p24
    $region15: #{tpu_custom_call.1} parent=1 // pred_check_branch
      %232 = sbr.rel (%p230) target = $region17
    $region16: #{tpu_custom_call.1} parent=1 // pred_region
      %v233 = vld [vmem:[#allocation2] sm:$0xff]
      %v234 = vld [vmem:[#allocation2 + $0x8] sm:$0xff]
      %v235 = vld [vmem:[#allocation2 + $0x10] sm:$0xff]
      %v236 = vld [vmem:[#allocation2 + $0x18] sm:$0xff]
      %v237 = vld [vmem:[#allocation2 + $0x20] sm:$0xff]
      %v238 = vld [vmem:[#allocation2 + $0x28] sm:$0xff]
      %v239 = vld [vmem:[#allocation2 + $0x30] sm:$0xff]
      %v240 = vld [vmem:[#allocation2 + $0x38] sm:$0xff]
      %v241 = vld [vmem:[#allocation2 + $0x40] sm:$0xff]
      %v242 = vld [vmem:[#allocation2 + $0x48] sm:$0xff]
      %v243 = vld [vmem:[#allocation2 + $0x50] sm:$0xff]
      %v244 = vld [vmem:[#allocation2 + $0x58] sm:$0xff]
      %v245 = vld [vmem:[#allocation2 + $0x60] sm:$0xff]
      %v246 = vld [vmem:[#allocation2 + $0x68] sm:$0xff]
      %v247 = vld [vmem:[#allocation2 + $0x70] sm:$0xff]
      %v248 = vld [vmem:[#allocation2 + $0x78] sm:$0xff]
      %vm249 = vcmp.gt.f32.partialorder %v233, 0.0
      %vm250 = vcmp.gt.f32.partialorder %v234, 0.0
      %vm251 = vcmp.gt.f32.partialorder %v235, 0.0
      %vm252 = vcmp.gt.f32.partialorder %v236, 0.0
      %vm253 = vcmp.gt.f32.partialorder %v237, 0.0
      %vm254 = vcmp.gt.f32.partialorder %v238, 0.0
      %vm255 = vcmp.gt.f32.partialorder %v239, 0.0
      %vm256 = vcmp.gt.f32.partialorder %v240, 0.0
      %vm257 = vcmp.gt.f32.partialorder %v241, 0.0
      %vm258 = vcmp.gt.f32.partialorder %v242, 0.0
      %vm259 = vcmp.gt.f32.partialorder %v243, 0.0
      %vm260 = vcmp.gt.f32.partialorder %v244, 0.0
      %vm261 = vcmp.gt.f32.partialorder %v245, 0.0
      %vm262 = vcmp.gt.f32.partialorder %v246, 0.0
      %vm263 = vcmp.gt.f32.partialorder %v247, 0.0
      %vm264 = vcmp.gt.f32.partialorder %v248, 0.0
      %v265 = vrsqrt.pop %v233
      %v266 = vmul.f32 %v265, %v233
      %v267 = vmul.f32 %v266, %v265
      %v268 = vmul.f32 0.5, %v267
      %v269 = vsub.f32 1.5, %v268
      %v270 = vmul.f32 %v265, %v269
      %vm271 = vweird.f32 %v233
      %vm272 = vweird.f32 %v265
      %vm273 = vmor %vm271, %vm272
      %v274 = vsel %vm273, %v265, %v270
      %v275 = vrsqrt.pop %v234
      %v276 = vmul.f32 %v275, %v234
      %v277 = vmul.f32 %v276, %v275
      %v278 = vmul.f32 0.5, %v277
      %v279 = vsub.f32 1.5, %v278
      %v280 = vmul.f32 %v275, %v279
      %vm281 = vweird.f32 %v234
      %vm282 = vweird.f32 %v275
      %vm283 = vmor %vm281, %vm282
      %v284 = vsel %vm283, %v275, %v280
      %v285 = vrsqrt.pop %v235
      %v286 = vmul.f32 %v285, %v235
      %v287 = vmul.f32 %v286, %v285
      %v288 = vmul.f32 0.5, %v287
      %v289 = vsub.f32 1.5, %v288
      %v290 = vmul.f32 %v285, %v289
      %vm291 = vweird.f32 %v235
      %vm292 = vweird.f32 %v285
      %vm293 = vmor %vm291, %vm292
      %v294 = vsel %vm293, %v285, %v290
      %v295 = vrsqrt.pop %v236
      %v296 = vmul.f32 %v295, %v236
      %v297 = vmul.f32 %v296, %v295
      %v298 = vmul.f32 0.5, %v297
      %v299 = vsub.f32 1.5, %v298
      %v300 = vmul.f32 %v295, %v299
      %vm301 = vweird.f32 %v236
      %vm302 = vweird.f32 %v295
      %vm303 = vmor %vm301, %vm302
      %v304 = vsel %vm303, %v295, %v300
      %v305 = vrsqrt.pop %v237
      %v306 = vmul.f32 %v305, %v237
      %v307 = vmul.f32 %v306, %v305
      %v308 = vmul.f32 0.5, %v307
      %v309 = vsub.f32 1.5, %v308
      %v310 = vmul.f32 %v305, %v309
      %vm311 = vweird.f32 %v237
      %vm312 = vweird.f32 %v305
      %vm313 = vmor %vm311, %vm312
      %v314 = vsel %vm313, %v305, %v310
      %v315 = vrsqrt.pop %v238
      %v316 = vmul.f32 %v315, %v238
      %v317 = vmul.f32 %v316, %v315
      %v318 = vmul.f32 0.5, %v317
      %v319 = vsub.f32 1.5, %v318
      %v320 = vmul.f32 %v315, %v319
      %vm321 = vweird.f32 %v238
      %vm322 = vweird.f32 %v315
      %vm323 = vmor %vm321, %vm322
      %v324 = vsel %vm323, %v315, %v320
      %v325 = vrsqrt.pop %v239
      %v326 = vmul.f32 %v325, %v239
      %v327 = vmul.f32 %v326, %v325
      %v328 = vmul.f32 0.5, %v327
      %v329 = vsub.f32 1.5, %v328
      %v330 = vmul.f32 %v325, %v329
      %vm331 = vweird.f32 %v239
      %vm332 = vweird.f32 %v325
      %vm333 = vmor %vm331, %vm332
      %v334 = vsel %vm333, %v325, %v330
      %v335 = vrsqrt.pop %v240
      %v336 = vmul.f32 %v335, %v240
      %v337 = vmul.f32 %v336, %v335
      %v338 = vmul.f32 0.5, %v337
      %v339 = vsub.f32 1.5, %v338
      %v340 = vmul.f32 %v335, %v339
      %vm341 = vweird.f32 %v240
      %vm342 = vweird.f32 %v335
      %vm343 = vmor %vm341, %vm342
      %v344 = vsel %vm343, %v335, %v340
      %v345 = vrsqrt.pop %v241
      %v346 = vmul.f32 %v345, %v241
      %v347 = vmul.f32 %v346, %v345
      %v348 = vmul.f32 0.5, %v347
      %v349 = vsub.f32 1.5, %v348
      %v350 = vmul.f32 %v345, %v349
      %vm351 = vweird.f32 %v241
      %vm352 = vweird.f32 %v345
      %vm353 = vmor %vm351, %vm352
      %v354 = vsel %vm353, %v345, %v350
      %v355 = vrsqrt.pop %v242
      %v356 = vmul.f32 %v355, %v242
      %v357 = vmul.f32 %v356, %v355
      %v358 = vmul.f32 0.5, %v357
      %v359 = vsub.f32 1.5, %v358
      %v360 = vmul.f32 %v355, %v359
      %vm361 = vweird.f32 %v242
      %vm362 = vweird.f32 %v355
      %vm363 = vmor %vm361, %vm362
      %v364 = vsel %vm363, %v355, %v360
      %v365 = vrsqrt.pop %v243
      %v366 = vmul.f32 %v365, %v243
      %v367 = vmul.f32 %v366, %v365
      %v368 = vmul.f32 0.5, %v367
      %v369 = vsub.f32 1.5, %v368
      %v370 = vmul.f32 %v365, %v369
      %vm371 = vweird.f32 %v243
      %vm372 = vweird.f32 %v365
      %vm373 = vmor %vm371, %vm372
      %v374 = vsel %vm373, %v365, %v370
      %v375 = vrsqrt.pop %v244
      %v376 = vmul.f32 %v375, %v244
      %v377 = vmul.f32 %v376, %v375
      %v378 = vmul.f32 0.5, %v377
      %v379 = vsub.f32 1.5, %v378
      %v380 = vmul.f32 %v375, %v379
      %vm381 = vweird.f32 %v244
      %vm382 = vweird.f32 %v375
      %vm383 = vmor %vm381, %vm382
      %v384 = vsel %vm383, %v375, %v380
      %v385 = vrsqrt.pop %v245
      %v386 = vmul.f32 %v385, %v245
      %v387 = vmul.f32 %v386, %v385
      %v388 = vmul.f32 0.5, %v387
      %v389 = vsub.f32 1.5, %v388
      %v390 = vmul.f32 %v385, %v389
      %vm391 = vweird.f32 %v245
      %vm392 = vweird.f32 %v385
      %vm393 = vmor %vm391, %vm392
      %v394 = vsel %vm393, %v385, %v390
      %v395 = vrsqrt.pop %v246
      %v396 = vmul.f32 %v395, %v246
      %v397 = vmul.f32 %v396, %v395
      %v398 = vmul.f32 0.5, %v397
      %v399 = vsub.f32 1.5, %v398
      %v400 = vmul.f32 %v395, %v399
      %vm401 = vweird.f32 %v246
      %vm402 = vweird.f32 %v395
      %vm403 = vmor %vm401, %vm402
      %v404 = vsel %vm403, %v395, %v400
      %v405 = vrsqrt.pop %v247
      %v406 = vmul.f32 %v405, %v247
      %v407 = vmul.f32 %v406, %v405
      %v408 = vmul.f32 0.5, %v407
      %v409 = vsub.f32 1.5, %v408
      %v410 = vmul.f32 %v405, %v409
      %vm411 = vweird.f32 %v247
      %vm412 = vweird.f32 %v405
      %vm413 = vmor %vm411, %vm412
      %v414 = vsel %vm413, %v405, %v410
      %v415 = vrsqrt.pop %v248
      %v416 = vmul.f32 %v415, %v248
      %v417 = vmul.f32 %v416, %v415
      %v418 = vmul.f32 0.5, %v417
      %v419 = vsub.f32 1.5, %v418
      %v420 = vmul.f32 %v415, %v419
      %vm421 = vweird.f32 %v248
      %vm422 = vweird.f32 %v415
      %vm423 = vmor %vm421, %vm422
      %v424 = vsel %vm423, %v415, %v420
      %v425 = vsel %vm249, %v274, 0.0
      %v426 = vsel %vm250, %v284, 0.0
      %v427 = vsel %vm251, %v294, 0.0
      %v428 = vsel %vm252, %v304, 0.0
      %v429 = vsel %vm253, %v314, 0.0
      %v430 = vsel %vm254, %v324, 0.0
      %v431 = vsel %vm255, %v334, 0.0
      %v432 = vsel %vm256, %v344, 0.0
      %v433 = vsel %vm257, %v354, 0.0
      %v434 = vsel %vm258, %v364, 0.0
      %v435 = vsel %vm259, %v374, 0.0
      %v436 = vsel %vm260, %v384, 0.0
      %v437 = vsel %vm261, %v394, 0.0
      %v438 = vsel %vm262, %v404, 0.0
      %v439 = vsel %vm263, %v414, 0.0
      %v440 = vsel %vm264, %v424, 0.0
      %441 = vst.msk [vmem:[%s1] sm:$0xff] %vm213, %v425
      %442 = vst.msk [vmem:[%s1 + $0x8] sm:$0xff] %vm213, %v426
      %443 = vst.msk [vmem:[%s1 + $0x10] sm:$0xff] %vm213, %v427
      %444 = vst.msk [vmem:[%s1 + $0x18] sm:$0xff] %vm213, %v428
      %445 = vst.msk [vmem:[%s1 + $0x20] sm:$0xff] %vm213, %v429
      %446 = vst.msk [vmem:[%s1 + $0x28] sm:$0xff] %vm213, %v430
      %447 = vst.msk [vmem:[%s1 + $0x30] sm:$0xff] %vm213, %v431
      %448 = vst.msk [vmem:[%s1 + $0x38] sm:$0xff] %vm213, %v432
      %449 = vst.msk [vmem:[%s1 + $0x40] sm:$0xff] %vm213, %v433
      %450 = vst.msk [vmem:[%s1 + $0x48] sm:$0xff] %vm213, %v434
      %451 = vst.msk [vmem:[%s1 + $0x50] sm:$0xff] %vm213, %v435
      %452 = vst.msk [vmem:[%s1 + $0x58] sm:$0xff] %vm213, %v436
      %453 = vst.msk [vmem:[%s1 + $0x60] sm:$0xff] %vm213, %v437
      %454 = vst.msk [vmem:[%s1 + $0x68] sm:$0xff] %vm213, %v438
      %455 = vst.msk [vmem:[%s1 + $0x70] sm:$0xff] %vm213, %v439
      %456 = vst.msk [vmem:[%s1 + $0x78] sm:$0xff] %vm213, %v440
    $region17: #{tpu_custom_call.1} parent=1 // pred_fallthru
      _
    // Predicated region
    $region18: #{tpu_custom_call.1} parent=1 // pred_check
      _
    $region19: #{tpu_custom_call.1} parent=1 // pred_check_branch
      %458 = sbr.rel (0) target = $region21
    $region20: #{tpu_custom_call.1} parent=1 // pred_region
      _
    $region21: #{tpu_custom_call.1} parent=1 // pred_fallthru
      _
    // Predicated region
    $region22: #{tpu_custom_call.1} parent=1 // pred_check
      _
    $region23: #{tpu_custom_call.1} parent=1 // pred_check_branch
      %460 = sbr.rel (0) target = $region25
    $region24: #{tpu_custom_call.1} parent=1 // pred_region
      _
    $region25: #{tpu_custom_call.1} parent=1 // pred_fallthru
      _
    %461 = vsyncpa [#allocation4], 1

</llo_original>
